<compile_context>
chip_gen: v7x
topology: tpu7x:2x2x1
jax: 0.10.0
libtpu: 0.0.40
codegen_flags: <defaults>
</compile_context>

<pallas_src>
import functools

import jax
import jax.numpy as jnp
from jax.experimental import pallas as pl
from jax.experimental.pallas import tpu as pltpu


# ----------------------------------------------------------------------------
# Fused Pallas kernel: full MLP + tanh (+ L2 norm) for one batch tile.
# Feature-major: every ref has shape (features, batch_tile).
# ----------------------------------------------------------------------------
def _fused_mlp_kernel(*refs, num_layers, relu_flags, norm):
    """refs = (xT_ref, w0, b0, w1, b1, ..., out1T_ref, outT_ref).

    xT_ref : (y_dim, tb)  bf16   -- batch on lanes (lane-dense)
    w_i    : (dout, din)  bf16   -- resident, constant index_map
    b_i    : (dout, 1)    f32
    outputs: (bit,  tb)   f32    -- lane-dense, unmasked stores
    """
    x_ref = refs[0]
    params = refs[1:1 + 2 * num_layers]
    out1_ref = refs[1 + 2 * num_layers]
    out_ref = refs[2 + 2 * num_layers]

    h = x_ref[...]                                   # bf16 (y_dim, tb)
    for li in range(num_layers):
        w = params[2 * li][...]                      # bf16 (dout, din)
        b = params[2 * li + 1][...]                  # f32  (dout, 1)
        # bf16 x bf16 -> f32 accumulation on the MXU.
        h = jnp.dot(w, h, preferred_element_type=jnp.float32) + b
        if relu_flags[li]:
            h = jnp.maximum(h, 0.0)
        if li + 1 < num_layers:
            h = h.astype(jnp.bfloat16)               # keep MXU operands bf16

    # First output: raw final-layer activations (out1), f32.
    out1_ref[...] = h.astype(out1_ref.dtype)

    # Epilogue in f32: tanh (+ per-column L2 normalization over features).
    t = jnp.tanh(h)
    if norm:
        sumsq = jnp.sum(t * t, axis=0, keepdims=True)    # (1, tb)
        # rsqrt -> EUP slot; multiply replaces the VPU divide.
        # No epsilon: matches PyTorch `out / norm` semantics exactly.
        t = t * jax.lax.rsqrt(sumsq)
    out_ref[...] = t.astype(out_ref.dtype)


# ----------------------------------------------------------------------------
# Tile-size / VMEM helpers
# ----------------------------------------------------------------------------
_VMEM_BUDGET_BYTES = 40 * 1024 * 1024   # conservative across v5e/v6e/v7x


def _vmem_bytes_estimate(y_dim, layer_dims, bit, tb):
    """Rough per-call VMEM footprint for a (features, tb) tile."""
    n = 0
    n += 2 * y_dim * tb * 2                 # double-buffered bf16 input tile
    n += 2 * 2 * bit * tb * 4               # 2 f32 output tiles, double-buffered
    for dout, din in layer_dims:            # resident weights/biases (x2 margin)
        n += 2 * (dout * din * 2 + dout * 4)
    widest = max(dout for dout, _ in layer_dims)
    n += 2 * widest * tb * (4 + 2)          # f32 + bf16 intermediate activations
    return n


def _pick_batch_tile(B, y_dim, layer_dims, bit, cap=4096):
    """Largest lane-aligned batch tile that fits VMEM; >=2 grid steps if B>128."""
    if B <= 128:
        return B                            # block == full dim is always legal
    half = pl.cdiv(B, 2)                    # guarantee >= 2 steps (v7x megacore)
    tb = min(128 * pl.cdiv(half, 128), cap)
    while tb > 128 and _vmem_bytes_estimate(y_dim, layer_dims, bit, tb) > _VMEM_BUDGET_BYTES:
        tb = max(128, (tb // 2) // 128 * 128)
    return tb


# ----------------------------------------------------------------------------
# pallas_call wrapper: single fused call, lane-major batch-tiled grid.
# ----------------------------------------------------------------------------
def fused_mlp_forward(x, params, relu_flags, norm, batch_tile=4096):
    B, y_dim = x.shape
    num_layers = len(params)
    layer_dims = [w.shape for (w, _) in params]      # (dout, din)
    bit = layer_dims[-1][0]

    # Lane-dense, bf16 input: (y_dim, B) with batch on lanes.
    xT = x.astype(jnp.bfloat16).T

    tb = _pick_batch_tile(B, y_dim, layer_dims, bit, batch_tile)
    grid = (pl.cdiv(B, tb),)

    in_specs = [pl.BlockSpec((y_dim, tb), lambda i: (0, i))]
    flat_args = [xT]
    for (w, b) in params:
        dout, din = w.shape
        # Constant-index full-array blocks: stay resident across the grid.
        in_specs.append(pl.BlockSpec((dout, din), lambda i: (0, 0)))
        in_specs.append(pl.BlockSpec((dout, 1), lambda i: (0, 0)))
        flat_args.extend([w, b])

    out_specs = (
        pl.BlockSpec((bit, tb), lambda i: (0, i)),
        pl.BlockSpec((bit, tb), lambda i: (0, i)),
    )
    out_shape = (
        jax.ShapeDtypeStruct((bit, B), jnp.float32),
        jax.ShapeDtypeStruct((bit, B), jnp.float32),
    )

    kernel = functools.partial(
        _fused_mlp_kernel,
        num_layers=num_layers,
        relu_flags=tuple(relu_flags),
        norm=norm,
    )

    vmem_limit = int(min(max(2 * _vmem_bytes_estimate(y_dim, layer_dims, bit, tb),
                             16 * 1024 * 1024),
                         48 * 1024 * 1024))

    out1_t, out_t = pl.pallas_call(
        kernel,
        out_shape=out_shape,
        grid=grid,
        in_specs=in_specs,
        out_specs=out_specs,
        compiler_params=pltpu.CompilerParams(
            dimension_semantics=("parallel",),       # batch tiles independent
            vmem_limit_bytes=vmem_limit,
        ),
    )(*flat_args)

    # Layout plumbing back to the PyTorch-facing (batch, bit) layout.
    return out1_t.T, out_t.T


# ----------------------------------------------------------------------------
# Module: mirrors ImageNet.__init__ layer construction + forward
# ----------------------------------------------------------------------------
class ImageNetPallas:
    def __init__(self, y_dim, bit, norm=True, mid_num1=64, mid_num2=64,
                 hiden_layer=3, key=None):
        self.norm = norm
        mid_num1 = mid_num1 if hiden_layer > 1 else bit

        # Build the (in_dim, out_dim) schedule + ReLU flags exactly like the
        # PyTorch constructor does.
        layers = [(y_dim, mid_num1)]
        relu_after = []
        if hiden_layer >= 2:
            relu_after.append(True)
            pre_num = mid_num1
            for i in range(hiden_layer - 2):
                if i == 0:
                    layers.append((mid_num1, mid_num2))
                else:
                    layers.append((mid_num2, mid_num2))
                relu_after.append(True)
                pre_num = mid_num2
            layers.append((pre_num, bit))
            relu_after.append(False)
        else:
            relu_after.append(False)

        # Deterministic parameter init.  Weights stored FEATURE-MAJOR
        # (out_features, in_features) in bf16; biases (out_features, 1) in f32.
        if key is None:
            key = jax.random.PRNGKey(42)
        self.params = []
        for (din, dout) in layers:
            key, kw, kb = jax.random.split(key, 3)
            w = jax.random.normal(kw, (dout, din), jnp.float32) * (1.0 / jnp.sqrt(din))
            b = jax.random.normal(kb, (dout, 1), jnp.float32) * 0.01
            self.params.append((w.astype(jnp.bfloat16), b))
        self.relu_after = relu_after

    def forward(self, x):
        return fused_mlp_forward(x, self.params, self.relu_after, self.norm)


# ----------------------------------------------------------------------------
# Pure-JAX reference (mirrors the kernel's mixed-precision numerics)
# ----------------------------------------------------------------------------
def reference_forward(model, x):
    h = x.astype(jnp.bfloat16).T
    n = len(model.params)
    for li, ((w, b), relu) in enumerate(zip(model.params, model.relu_after)):
        h = jnp.dot(w, h, preferred_element_type=jnp.float32) + b
        if relu:
            h = jnp.maximum(h, 0.0)
        if li + 1 < n:
            h = h.astype(jnp.bfloat16)
    out1 = h.T
    out = jnp.tanh(out1)
    if model.norm:
        out = out * jax.lax.rsqrt(jnp.sum(out * out, axis=1, keepdims=True))
    return out1, out


if __name__ == "__main__":
    root = jax.random.PRNGKey(0)
    k_params, k_x, k_x2, k_x3 = jax.random.split(root, 4)

    batch, y_dim, bit = 2, 32, 16
    model = ImageNetPallas(y_dim=y_dim, bit=bit, norm=True,
                           mid_num1=64, mid_num2=64, hiden_layer=3,
                           key=k_params)

    def check(xx):
        o1, o = model.forward(xx)
        o1 = jax.block_until_ready(o1)
        o = jax.block_until_ready(o)
        r1, r2 = reference_forward(model, xx)
        assert o1.shape == (xx.shape[0], bit) and o.shape == (xx.shape[0], bit)
        assert jnp.allclose(o1, r1, atol=2e-3, rtol=2e-3)
        assert jnp.allclose(o, r2, atol=2e-3, rtol=2e-3)

    # Small-batch check (single grid step, block == full dims).
    check(jax.random.normal(k_x, (batch, y_dim), jnp.float32))

    # Larger batch: exercises the lane-major tiled, 2-step "parallel" grid.
    check(jax.random.normal(k_x2, (512, y_dim), jnp.float32))

    # Non-multiple-of-tile batch: exercises the padded last tile
    # (padded lanes may hold NaN/inf internally but are never written back).
    check(jax.random.normal(k_x3, (300, y_dim), jnp.float32))

    print("KERNEL_OK")
</pallas_src>

<mosaic_0001>
module attributes {stable_mosaic.version = 11 : i64} {
  func.func @_fused_mlp_kernel(%arg0: i32, %arg1: memref<32x2xbf16, #tpu.memory_space<vmem>>, %arg2: memref<64x32xbf16, #tpu.memory_space<vmem>>, %arg3: memref<64x1xf32, #tpu.memory_space<vmem>>, %arg4: memref<64x64xbf16, #tpu.memory_space<vmem>>, %arg5: memref<64x1xf32, #tpu.memory_space<vmem>>, %arg6: memref<16x64xbf16, #tpu.memory_space<vmem>>, %arg7: memref<16x1xf32, #tpu.memory_space<vmem>>, %arg8: memref<16x2xf32, #tpu.memory_space<vmem>>, %arg9: memref<16x2xf32, #tpu.memory_space<vmem>>) attributes {dimension_semantics = [#tpu.dimension_semantics<parallel>], iteration_bounds = array<i64: 1>, scalar_prefetch = 0 : i64, scratch_operands = 0 : i64, tpu.core_type = #tpu.core_type<tc>, window_params = [{transform_indices = @transform_0, window_bounds = array<i64: 32, 2>}, {pipeline_mode = #tpu.pipeline_mode<synchronous>, transform_indices = @transform_1, window_bounds = array<i64: 64, 32>}, {pipeline_mode = #tpu.pipeline_mode<synchronous>, transform_indices = @transform_2, window_bounds = array<i64: 64, 1>}, {pipeline_mode = #tpu.pipeline_mode<synchronous>, transform_indices = @transform_3, window_bounds = array<i64: 64, 64>}, {pipeline_mode = #tpu.pipeline_mode<synchronous>, transform_indices = @transform_4, window_bounds = array<i64: 64, 1>}, {pipeline_mode = #tpu.pipeline_mode<synchronous>, transform_indices = @transform_5, window_bounds = array<i64: 16, 64>}, {pipeline_mode = #tpu.pipeline_mode<synchronous>, transform_indices = @transform_6, window_bounds = array<i64: 16, 1>}, {transform_indices = @transform_7, window_bounds = array<i64: 16, 2>}, {transform_indices = @transform_8, window_bounds = array<i64: 16, 2>}]} {
    %c0 = arith.constant 0 : index
    %c0_0 = arith.constant 0 : index
    %0 = vector.load %arg1[%c0, %c0_0] : memref<32x2xbf16, #tpu.memory_space<vmem>>, vector<32x2xbf16>
    %c0_1 = arith.constant 0 : index
    %c0_2 = arith.constant 0 : index
    %1 = vector.load %arg2[%c0_1, %c0_2] : memref<64x32xbf16, #tpu.memory_space<vmem>>, vector<64x32xbf16>
    %c0_3 = arith.constant 0 : index
    %c0_4 = arith.constant 0 : index
    %2 = vector.load %arg3[%c0_3, %c0_4] : memref<64x1xf32, #tpu.memory_space<vmem>>, vector<64x1xf32>
    %cst = arith.constant dense<0.000000e+00> : vector<64x2xf32>
    %3 = tpu.matmul %1, %0, %cst {dimension_numbers = #tpu.dot_dimension_numbers<[1], [0], [0], [1], [0, 0, 1, 1], [], []>} : vector<64x32xbf16>, vector<32x2xbf16>, vector<64x2xf32> -> vector<64x2xf32>
    %4 = vector.broadcast %2 : vector<64x1xf32> to vector<64x2xf32>
    %5 = arith.addf %3, %4 : vector<64x2xf32>
    %cst_5 = arith.constant 0.000000e+00 : f32
    %6 = vector.broadcast %cst_5 : f32 to vector<64x2xf32>
    %7 = arith.maximumf %5, %6 : vector<64x2xf32>
    %8 = arith.truncf %7 : vector<64x2xf32> to vector<64x2xbf16>
    %c0_6 = arith.constant 0 : index
    %c0_7 = arith.constant 0 : index
    %9 = vector.load %arg4[%c0_6, %c0_7] : memref<64x64xbf16, #tpu.memory_space<vmem>>, vector<64x64xbf16>
    %c0_8 = arith.constant 0 : index
    %c0_9 = arith.constant 0 : index
    %10 = vector.load %arg5[%c0_8, %c0_9] : memref<64x1xf32, #tpu.memory_space<vmem>>, vector<64x1xf32>
    %cst_10 = arith.constant dense<0.000000e+00> : vector<64x2xf32>
    %11 = tpu.matmul %9, %8, %cst_10 {dimension_numbers = #tpu.dot_dimension_numbers<[1], [0], [0], [1], [0, 0, 1, 1], [], []>} : vector<64x64xbf16>, vector<64x2xbf16>, vector<64x2xf32> -> vector<64x2xf32>
    %12 = vector.broadcast %10 : vector<64x1xf32> to vector<64x2xf32>
    %13 = arith.addf %11, %12 : vector<64x2xf32>
    %cst_11 = arith.constant 0.000000e+00 : f32
    %14 = vector.broadcast %cst_11 : f32 to vector<64x2xf32>
    %15 = arith.maximumf %13, %14 : vector<64x2xf32>
    %16 = arith.truncf %15 : vector<64x2xf32> to vector<64x2xbf16>
    %c0_12 = arith.constant 0 : index
    %c0_13 = arith.constant 0 : index
    %17 = vector.load %arg6[%c0_12, %c0_13] : memref<16x64xbf16, #tpu.memory_space<vmem>>, vector<16x64xbf16>
    %c0_14 = arith.constant 0 : index
    %c0_15 = arith.constant 0 : index
    %18 = vector.load %arg7[%c0_14, %c0_15] : memref<16x1xf32, #tpu.memory_space<vmem>>, vector<16x1xf32>
    %cst_16 = arith.constant dense<0.000000e+00> : vector<16x2xf32>
    %19 = tpu.matmul %17, %16, %cst_16 {dimension_numbers = #tpu.dot_dimension_numbers<[1], [0], [0], [1], [0, 0, 1, 1], [], []>} : vector<16x64xbf16>, vector<64x2xbf16>, vector<16x2xf32> -> vector<16x2xf32>
    %20 = vector.broadcast %18 : vector<16x1xf32> to vector<16x2xf32>
    %21 = arith.addf %19, %20 : vector<16x2xf32>
    %c0_17 = arith.constant 0 : index
    %c0_18 = arith.constant 0 : index
    %22 = vector.load %arg8[%c0_17, %c0_18] : memref<16x2xf32, #tpu.memory_space<vmem>>, vector<16x2xf32>
    tpu.vector_store %arg8[%c0_17, %c0_18], %21 {strides = array<i32>} : memref<16x2xf32, #tpu.memory_space<vmem>>, vector<16x2xf32>,
    %23 = math.tanh %21 : vector<16x2xf32>
    %24 = arith.mulf %23, %23 : vector<16x2xf32>
    %cst_19 = arith.constant dense<0.000000e+00> : vector<2xf32>
    %25 = vector.multi_reduction <add>, %24, %cst_19 [0] : vector<16x2xf32> to vector<2xf32>
    %26 = vector.shape_cast %25 : vector<2xf32> to vector<1x2xf32>
    %27 = math.rsqrt %26 : vector<1x2xf32>
    %28 = vector.broadcast %27 : vector<1x2xf32> to vector<16x2xf32>
    %29 = arith.mulf %23, %28 : vector<16x2xf32>
    %c0_20 = arith.constant 0 : index
    %c0_21 = arith.constant 0 : index
    %30 = vector.load %arg9[%c0_20, %c0_21] : memref<16x2xf32, #tpu.memory_space<vmem>>, vector<16x2xf32>
    tpu.vector_store %arg9[%c0_20, %c0_21], %29 {strides = array<i32>} : memref<16x2xf32, #tpu.memory_space<vmem>>, vector<16x2xf32>,
    return
  }
  func.func @transform_0(%arg0: i32) -> (i32, i32) {
    %c0_i32 = arith.constant 0 : i32
    %c0_i32_0 = arith.constant 0 : i32
    return %c0_i32, %arg0 : i32, i32
  }
  func.func @transform_1(%arg0: i32) -> (i32, i32) {
    %c0_i32 = arith.constant 0 : i32
    %c0_i32_0 = arith.constant 0 : i32
    %c0_i32_1 = arith.constant 0 : i32
    return %c0_i32, %c0_i32_0 : i32, i32
  }
  func.func @transform_2(%arg0: i32) -> (i32, i32) {
    %c0_i32 = arith.constant 0 : i32
    %c0_i32_0 = arith.constant 0 : i32
    %c0_i32_1 = arith.constant 0 : i32
    return %c0_i32, %c0_i32_0 : i32, i32
  }
  func.func @transform_3(%arg0: i32) -> (i32, i32) {
    %c0_i32 = arith.constant 0 : i32
    %c0_i32_0 = arith.constant 0 : i32
    %c0_i32_1 = arith.constant 0 : i32
    return %c0_i32, %c0_i32_0 : i32, i32
  }
  func.func @transform_4(%arg0: i32) -> (i32, i32) {
    %c0_i32 = arith.constant 0 : i32
    %c0_i32_0 = arith.constant 0 : i32
    %c0_i32_1 = arith.constant 0 : i32
    return %c0_i32, %c0_i32_0 : i32, i32
  }
  func.func @transform_5(%arg0: i32) -> (i32, i32) {
    %c0_i32 = arith.constant 0 : i32
    %c0_i32_0 = arith.constant 0 : i32
    %c0_i32_1 = arith.constant 0 : i32
    return %c0_i32, %c0_i32_0 : i32, i32
  }
  func.func @transform_6(%arg0: i32) -> (i32, i32) {
    %c0_i32 = arith.constant 0 : i32
    %c0_i32_0 = arith.constant 0 : i32
    %c0_i32_1 = arith.constant 0 : i32
    return %c0_i32, %c0_i32_0 : i32, i32
  }
  func.func @transform_7(%arg0: i32) -> (i32, i32) {
    %c0_i32 = arith.constant 0 : i32
    %c0_i32_0 = arith.constant 0 : i32
    return %c0_i32, %arg0 : i32, i32
  }
  func.func @transform_8(%arg0: i32) -> (i32, i32) {
    %c0_i32 = arith.constant 0 : i32
    %c0_i32_0 = arith.constant 0 : i32
    return %c0_i32, %arg0 : i32, i32
  }
}

</mosaic_0001>

<llo_original>
// kernel: tpu_custom_call.1
$region0: #{tpu_custom_call.1}
  #allocation0 [shape = 'u32[]', space=smem, size = 0x4, offset = 0x4, fixed_abs, tag = 'smem constant byte address 0x4 - core index']
  #allocation1 [shape = 'u32[144,128]{1,0:T(1,128)}', space=vmem, size = 0x12000, scoped, tag = 'internal scratch']
  %s0 = inlined_call_operand.vmem [shape: bf16[32,2], index: 0, kind: input, shape index: {}]
  %s1 = inlined_call_operand.vmem [shape: bf16[64,32], index: 1, kind: input, shape index: {}]
  %s2 = inlined_call_operand.vmem [shape: f32[64,1], index: 2, kind: input, shape index: {}]
  %s3 = inlined_call_operand.vmem [shape: bf16[64,64], index: 3, kind: input, shape index: {}]
  %s4 = inlined_call_operand.vmem [shape: f32[64,1], index: 4, kind: input, shape index: {}]
  %s5 = inlined_call_operand.vmem [shape: bf16[16,64], index: 5, kind: input, shape index: {}]
  %s6 = inlined_call_operand.vmem [shape: f32[16,1], index: 6, kind: input, shape index: {}]
  %s7 = inlined_call_operand.vmem [shape: f32[16,2], index: 7, kind: output, shape index: {0}]
  %s8 = inlined_call_operand.vmem [shape: f32[16,2], index: 8, kind: output, shape index: {1}]
  %9 = xla_tuple %s7, %s8
  %s10 = sld [smem:[#allocation0]]
  $region46: #{tpu_custom_call.1} parent=0
    _
  %s12 = ssub.s32 1, %s10
  %s13 = scalar_select 0, %s12, %s10
  // Predicated region
  $region2: #{tpu_custom_call.1} parent=0 // pred_check
    _
  $region3: #{tpu_custom_call.1} parent=0 // pred_check_branch
    %15 = sbr.rel (0) target = $region5
  $region4: #{tpu_custom_call.1} parent=0 // pred_region
    _
  $region5: #{tpu_custom_call.1} parent=0 // pred_fallthru
    _
  // Predicated region
  $region6: #{tpu_custom_call.1} parent=0 // pred_check
    _
  $region7: #{tpu_custom_call.1} parent=0 // pred_check_branch
    %17 = sbr.rel (0) target = $region9
  $region8: #{tpu_custom_call.1} parent=0 // pred_region
    _
  $region9: #{tpu_custom_call.1} parent=0 // pred_fallthru
    _
  // Predicated region
  $region10: #{tpu_custom_call.1} parent=0 // pred_check
    _
  $region11: #{tpu_custom_call.1} parent=0 // pred_check_branch
    %19 = sbr.rel (0) target = $region13
  $region12: #{tpu_custom_call.1} parent=0 // pred_region
    _
  $region13: #{tpu_custom_call.1} parent=0 // pred_fallthru
    _
  // Predicated region
  $region14: #{tpu_custom_call.1} parent=0 // pred_check
    _
  $region15: #{tpu_custom_call.1} parent=0 // pred_check_branch
    %21 = sbr.rel (0) target = $region17
  $region16: #{tpu_custom_call.1} parent=0 // pred_region
    _
  $region17: #{tpu_custom_call.1} parent=0 // pred_fallthru
    _
  // Predicated region
  $region18: #{tpu_custom_call.1} parent=0 // pred_check
    _
  $region19: #{tpu_custom_call.1} parent=0 // pred_check_branch
    %23 = sbr.rel (0) target = $region21
  $region20: #{tpu_custom_call.1} parent=0 // pred_region
    _
  $region21: #{tpu_custom_call.1} parent=0 // pred_fallthru
    _
  // Predicated region
  $region22: #{tpu_custom_call.1} parent=0 // pred_check
    _
  $region23: #{tpu_custom_call.1} parent=0 // pred_check_branch
    %25 = sbr.rel (0) target = $region25
  $region24: #{tpu_custom_call.1} parent=0 // pred_region
    _
  $region25: #{tpu_custom_call.1} parent=0 // pred_fallthru
    _
  // Predicated region
  $region26: #{tpu_custom_call.1} parent=0 // pred_check
    _
  $region27: #{tpu_custom_call.1} parent=0 // pred_check_branch
    %27 = sbr.rel (0) target = $region29
  $region28: #{tpu_custom_call.1} parent=0 // pred_region
    _
  $region29: #{tpu_custom_call.1} parent=0 // pred_fallthru
    _
  %v29 = vld [vmem:[%s0] sm:$0xf]
  %v30 = vld [vmem:[%s0 + $0x4] sm:$0xf]
  %v31 = vld [vmem:[%s0 + $0x8] sm:$0xf]
  %v32 = vld [vmem:[%s0 + $0xc] sm:$0xf]
  %v33 = vld [vmem:[%s1] sm:$0xf]
  %v34 = vld [vmem:[%s1 + $0x4] sm:$0xf]
  %v35 = vld [vmem:[%s1 + $0x8] sm:$0xf]
  %v36 = vld [vmem:[%s1 + $0xc] sm:$0xf]
  %v37 = vld [vmem:[%s1 + $0x10] sm:$0xf]
  %v38 = vld [vmem:[%s1 + $0x14] sm:$0xf]
  %v39 = vld [vmem:[%s1 + $0x18] sm:$0xf]
  %v40 = vld [vmem:[%s1 + $0x1c] sm:$0xf]
  %v41 = vld [vmem:[%s2] sm:$0xff]
  %v42 = vld [vmem:[%s2 + $0x8] sm:$0xff]
  %v43 = vld [vmem:[%s2 + $0x10] sm:$0xff]
  %v44 = vld [vmem:[%s2 + $0x18] sm:$0xff]
  %v45 = vld [vmem:[%s2 + $0x20] sm:$0xff]
  %v46 = vld [vmem:[%s2 + $0x28] sm:$0xff]
  %v47 = vld [vmem:[%s2 + $0x30] sm:$0xff]
  %v48 = vld [vmem:[%s2 + $0x38] sm:$0xff]
  %50 = vset.pattern.permute.xlu0 0
  %51 = vperm.xlu0 %50, %v41
  %v52 = vpop.permute.xlu0 %51
  %55 = vset.pattern.permute.xlu0 0
  %56 = vperm.xlu0 %55, %v42
  %v57 = vpop.permute.xlu0 %56
  %60 = vset.pattern.permute.xlu0 0
  %61 = vperm.xlu0 %60, %v43
  %v62 = vpop.permute.xlu0 %61
  %65 = vset.pattern.permute.xlu0 0
  %66 = vperm.xlu0 %65, %v44
  %v67 = vpop.permute.xlu0 %66
  %70 = vset.pattern.permute.xlu0 0
  %71 = vperm.xlu0 %70, %v45
  %v72 = vpop.permute.xlu0 %71
  %75 = vset.pattern.permute.xlu0 0
  %76 = vperm.xlu0 %75, %v46
  %v77 = vpop.permute.xlu0 %76
  %80 = vset.pattern.permute.xlu0 0
  %81 = vperm.xlu0 %80, %v47
  %v82 = vpop.permute.xlu0 %81
  %85 = vset.pattern.permute.xlu0 0
  %86 = vperm.xlu0 %85, %v48
  %v87 = vpop.permute.xlu0 %86
  %v97 = vunpack.c.l.b16 %v33
  %v98 = vunpack.c.l.b16 %v34
  %v99 = vunpack.c.l.b16 %v35
  %v100 = vunpack.c.l.b16 %v36
  %v101 = vunpack.c.l.b16 %v37
  %v102 = vunpack.c.l.b16 %v38
  %v103 = vunpack.c.l.b16 %v39
  %v104 = vunpack.c.l.b16 %v40
  %v105 = vpack.c.b16 %v98, %v97
  %v106 = vpack.c.b16 %v100, %v99
  %v107 = vpack.c.b16 %v102, %v101
  %v108 = vpack.c.b16 %v104, %v103
  %v113 = vunpack.c.l.b16 %v29
  %v114 = vunpack.c.l.b16 %v30
  %v115 = vunpack.c.l.b16 %v31
  %v116 = vunpack.c.l.b16 %v32
  %v117 = vpack.c.b16 %v114, %v113
  %v118 = vpack.c.b16 %v116, %v115
  %vm121 = vcmask 261120
  %v123 = vsel %vm121, %v105, 0
  %v126 = vsel %vm121, %v106, 0
  %v129 = vsel %vm121, %v107, 0
  %v132 = vsel %vm121, %v108, 0
  %134 = vmatprep.subr.bf16.mxu0 0
  %135 = vmatpush1.bf16.msra.mxu0 %v117
  %136 = vmatprep.subr.bf16.mxu0 0
  %137 = vmatpush1.bf16.msra.mxu0 %v118
  %138 = vmatprep.subr.bf16.mxu0 0
  %139 = vmatpush1.bf16.msra.mxu0 0
  %140 = vmatprep.subr.bf16.mxu0 0
  %141 = vmatpush1.bf16.msra.mxu0 0
  %142 = vmatprep.subr.bf16.mxu0 0
  %143 = vmatpush1.bf16.msra.mxu0 0
  %144 = vmatprep.subr.bf16.mxu0 0
  %145 = vmatpush1.bf16.msra.mxu0 0
  %146 = vmatprep.subr.bf16.mxu0 0
  %147 = vmatpush1.bf16.msra.mxu0 0
  %148 = vmatprep.subr.bf16.mxu0 0
  %149 = vmatpush1.bf16.msra.mxu0 0
  %150 = vmatprep.subr.bf16.mxu0 0
  %151 = vmatpush1.bf16.msra.mxu0 0
  %152 = vmatprep.subr.bf16.mxu0 0
  %153 = vmatpush1.bf16.msra.mxu0 0
  %154 = vmatprep.subr.bf16.mxu0 0
  %155 = vmatpush1.bf16.msra.mxu0 0
  %156 = vmatprep.subr.bf16.mxu0 0
  %157 = vmatpush1.bf16.msra.mxu0 0
  %158 = vmatprep.subr.bf16.mxu0 0
  %159 = vmatpush1.bf16.msra.mxu0 0
  %160 = vmatprep.subr.bf16.mxu0 0
  %161 = vmatpush1.bf16.msra.mxu0 0
  %162 = vmatprep.subr.bf16.mxu0 0
  %163 = vmatpush1.bf16.msra.mxu0 0
  %164 = vmatprep.subr.bf16.mxu0 0
  %165 = vmatpush1.bf16.msra.mxu0 0
  %166 = vmatprep.mubr.bf16.mxu0 0
  %167 = vmatmul.mubr.bf16.gmra.mrb[0].mxu0 %v123
  %v168 = vpop.f32.mrb[0].mxu0
  %v169 = vadd.f32 %v52, %v168
  %v170 = vpop.f32.mrb[0].mxu0
  %v171 = vpop.f32.mrb[0].mxu0
  %v172 = vadd.f32 %v57, %v171
  %v173 = vpop.f32.mrb[0].mxu0
  %174 = vmatprep.mubr.bf16.mxu0 0
  %175 = vmatmul.mubr.bf16.gmra.mrb[0].mxu0 %v126
  %v176 = vpop.f32.mrb[0].mxu0
  %v177 = vadd.f32 %v62, %v176
  %v178 = vpop.f32.mrb[0].mxu0
  %v179 = vpop.f32.mrb[0].mxu0
  %v180 = vadd.f32 %v67, %v179
  %v181 = vpop.f32.mrb[0].mxu0
  %182 = vmatprep.mubr.bf16.mxu0 0
  %183 = vmatmul.mubr.bf16.gmra.mrb[0].mxu0 %v129
  %v184 = vpop.f32.mrb[0].mxu0
  %v185 = vadd.f32 %v72, %v184
  %v186 = vpop.f32.mrb[0].mxu0
  %v187 = vpop.f32.mrb[0].mxu0
  %v188 = vadd.f32 %v77, %v187
  %v189 = vpop.f32.mrb[0].mxu0
  %190 = vmatprep.mubr.bf16.mxu0 0
  %191 = vmatmul.mubr.bf16.gmra.mrb[0].mxu0 %v132
  %v192 = vpop.f32.mrb[0].mxu0
  %v193 = vadd.f32 %v82, %v192
  %v194 = vpop.f32.mrb[0].mxu0
  %v195 = vpop.f32.mrb[0].mxu0
  %v196 = vadd.f32 %v87, %v195
  %v197 = vpop.f32.mrb[0].mxu0
  %198 = vdwg.mxu0
  %v199 = vmax.f32 %v169, 0.0
  %v200 = vmax.f32 %v172, 0.0
  %v201 = vmax.f32 %v177, 0.0
  %v202 = vmax.f32 %v180, 0.0
  %v203 = vmax.f32 %v185, 0.0
  %v204 = vmax.f32 %v188, 0.0
  %v205 = vmax.f32 %v193, 0.0
  %v206 = vmax.f32 %v196, 0.0
  %v207 = vpack.c.bf16 %v200, %v199
  %v208 = vpack.c.bf16 %v202, %v201
  %v209 = vpack.c.bf16 %v204, %v203
  %v210 = vpack.c.bf16 %v206, %v205
  %v211 = vld [vmem:[%s3] sm:$0xf]
  %v212 = vld [vmem:[%s3 + $0x4] sm:$0xf]
  %v213 = vld [vmem:[%s3 + $0x8] sm:$0xf]
  %v214 = vld [vmem:[%s3 + $0xc] sm:$0xf]
  %v215 = vld [vmem:[%s3 + $0x10] sm:$0xf]
  %v216 = vld [vmem:[%s3 + $0x14] sm:$0xf]
  %v217 = vld [vmem:[%s3 + $0x18] sm:$0xf]
  %v218 = vld [vmem:[%s3 + $0x1c] sm:$0xf]
  %v219 = vld [vmem:[%s4] sm:$0xff]
  %v220 = vld [vmem:[%s4 + $0x8] sm:$0xff]
  %v221 = vld [vmem:[%s4 + $0x10] sm:$0xff]
  %v222 = vld [vmem:[%s4 + $0x18] sm:$0xff]
  %v223 = vld [vmem:[%s4 + $0x20] sm:$0xff]
  %v224 = vld [vmem:[%s4 + $0x28] sm:$0xff]
  %v225 = vld [vmem:[%s4 + $0x30] sm:$0xff]
  %v226 = vld [vmem:[%s4 + $0x38] sm:$0xff]
  %228 = vset.pattern.permute.xlu0 0
  %229 = vperm.xlu0 %228, %v219
  %v230 = vpop.permute.xlu0 %229
  %233 = vset.pattern.permute.xlu0 0
  %234 = vperm.xlu0 %233, %v220
  %v235 = vpop.permute.xlu0 %234
  %238 = vset.pattern.permute.xlu0 0
  %239 = vperm.xlu0 %238, %v221
  %v240 = vpop.permute.xlu0 %239
  %243 = vset.pattern.permute.xlu0 0
  %244 = vperm.xlu0 %243, %v222
  %v245 = vpop.permute.xlu0 %244
  %248 = vset.pattern.permute.xlu0 0
  %249 = vperm.xlu0 %248, %v223
  %v250 = vpop.permute.xlu0 %249
  %253 = vset.pattern.permute.xlu0 0
  %254 = vperm.xlu0 %253, %v224
  %v255 = vpop.permute.xlu0 %254
  %258 = vset.pattern.permute.xlu0 0
  %259 = vperm.xlu0 %258, %v225
  %v260 = vpop.permute.xlu0 %259
  %263 = vset.pattern.permute.xlu0 0
  %264 = vperm.xlu0 %263, %v226
  %v265 = vpop.permute.xlu0 %264
  %v275 = vunpack.c.l.b16 %v211
  %v276 = vunpack.c.l.b16 %v212
  %v277 = vunpack.c.l.b16 %v213
  %v278 = vunpack.c.l.b16 %v214
  %v279 = vunpack.c.l.b16 %v215
  %v280 = vunpack.c.l.b16 %v216
  %v281 = vunpack.c.l.b16 %v217
  %v282 = vunpack.c.l.b16 %v218
  %v283 = vpack.c.b16 %v276, %v275
  %v284 = vpack.c.b16 %v278, %v277
  %v285 = vpack.c.b16 %v280, %v279
  %v286 = vpack.c.b16 %v282, %v281
  %vm287 = vcmask 523264
  %v289 = vsel %vm287, %v283, 0
  %v292 = vsel %vm287, %v284, 0
  %v295 = vsel %vm287, %v285, 0
  %v298 = vsel %vm287, %v286, 0
  %300 = vmatprep.subr.bf16.mxu0 0
  %301 = vmatpush1.bf16.msra.mxu0 %v207
  %302 = vmatprep.subr.bf16.mxu0 0
  %303 = vmatpush1.bf16.msra.mxu0 %v208
  %304 = vmatprep.subr.bf16.mxu0 0
  %305 = vmatpush1.bf16.msra.mxu0 %v209
  %306 = vmatprep.subr.bf16.mxu0 0
  %307 = vmatpush1.bf16.msra.mxu0 %v210
  %308 = vmatprep.subr.bf16.mxu0 0
  %309 = vmatpush1.bf16.msra.mxu0 0
  %310 = vmatprep.subr.bf16.mxu0 0
  %311 = vmatpush1.bf16.msra.mxu0 0
  %312 = vmatprep.subr.bf16.mxu0 0
  %313 = vmatpush1.bf16.msra.mxu0 0
  %314 = vmatprep.subr.bf16.mxu0 0
  %315 = vmatpush1.bf16.msra.mxu0 0
  %316 = vmatprep.subr.bf16.mxu0 0
  %317 = vmatpush1.bf16.msra.mxu0 0
  %318 = vmatprep.subr.bf16.mxu0 0
  %319 = vmatpush1.bf16.msra.mxu0 0
  %320 = vmatprep.subr.bf16.mxu0 0
  %321 = vmatpush1.bf16.msra.mxu0 0
  %322 = vmatprep.subr.bf16.mxu0 0
  %323 = vmatpush1.bf16.msra.mxu0 0
  %324 = vmatprep.subr.bf16.mxu0 0
  %325 = vmatpush1.bf16.msra.mxu0 0
  %326 = vmatprep.subr.bf16.mxu0 0
  %327 = vmatpush1.bf16.msra.mxu0 0
  %328 = vmatprep.subr.bf16.mxu0 0
  %329 = vmatpush1.bf16.msra.mxu0 0
  %330 = vmatprep.subr.bf16.mxu0 0
  %331 = vmatpush1.bf16.msra.mxu0 0
  %332 = vmatprep.mubr.bf16.mxu0 0
  %333 = vmatmul.mubr.bf16.gmra.mrb[0].mxu0 %v289
  %v334 = vpop.f32.mrb[0].mxu0
  %v335 = vadd.f32 %v230, %v334
  %v336 = vpop.f32.mrb[0].mxu0
  %v337 = vpop.f32.mrb[0].mxu0
  %v338 = vadd.f32 %v235, %v337
  %v339 = vpop.f32.mrb[0].mxu0
  %340 = vmatprep.mubr.bf16.mxu0 0
  %341 = vmatmul.mubr.bf16.gmra.mrb[0].mxu0 %v292
  %v342 = vpop.f32.mrb[0].mxu0
  %v343 = vadd.f32 %v240, %v342
  %v344 = vpop.f32.mrb[0].mxu0
  %v345 = vpop.f32.mrb[0].mxu0
  %v346 = vadd.f32 %v245, %v345
  %v347 = vpop.f32.mrb[0].mxu0
  %348 = vmatprep.mubr.bf16.mxu0 0
  %349 = vmatmul.mubr.bf16.gmra.mrb[0].mxu0 %v295
  %v350 = vpop.f32.mrb[0].mxu0
  %v351 = vadd.f32 %v250, %v350
  %v352 = vpop.f32.mrb[0].mxu0
  %v353 = vpop.f32.mrb[0].mxu0
  %v354 = vadd.f32 %v255, %v353
  %v355 = vpop.f32.mrb[0].mxu0
  %356 = vmatprep.mubr.bf16.mxu0 0
  %357 = vmatmul.mubr.bf16.gmra.mrb[0].mxu0 %v298
  %v358 = vpop.f32.mrb[0].mxu0
  %v359 = vadd.f32 %v260, %v358
  %v360 = vpop.f32.mrb[0].mxu0
  %v361 = vpop.f32.mrb[0].mxu0
  %v362 = vadd.f32 %v265, %v361
  %v363 = vpop.f32.mrb[0].mxu0
  %364 = vdwg.mxu0
  %v365 = vmax.f32 %v335, 0.0
  %v366 = vmax.f32 %v338, 0.0
  %v367 = vmax.f32 %v343, 0.0
  %v368 = vmax.f32 %v346, 0.0
  %v369 = vmax.f32 %v351, 0.0
  %v370 = vmax.f32 %v354, 0.0
  %v371 = vmax.f32 %v359, 0.0
  %v372 = vmax.f32 %v362, 0.0
  %v373 = vpack.c.bf16 %v366, %v365
  %v374 = vpack.c.bf16 %v368, %v367
  %v375 = vpack.c.bf16 %v370, %v369
  %v376 = vpack.c.bf16 %v372, %v371
  %v377 = vld [vmem:[%s5] sm:$0xf]
  %v378 = vld [vmem:[%s5 + $0x4] sm:$0xf]
  %v379 = vld [vmem:[%s6] sm:$0xff]
  %v380 = vld [vmem:[%s6 + $0x8] sm:$0xff]
  %382 = vset.pattern.permute.xlu0 0
  %383 = vperm.xlu0 %382, %v379
  %v384 = vpop.permute.xlu0 %383
  %387 = vset.pattern.permute.xlu0 0
  %388 = vperm.xlu0 %387, %v380
  %v389 = vpop.permute.xlu0 %388
  %v393 = vunpack.c.l.b16 %v377
  %v394 = vunpack.c.l.b16 %v378
  %v395 = vpack.c.b16 %v394, %v393
  %v397 = vsel %vm287, %v395, 0
  %399 = vmatprep.subr.bf16.mxu0 0
  %400 = vmatpush1.bf16.msra.mxu0 %v373
  %401 = vmatprep.subr.bf16.mxu0 0
  %402 = vmatpush1.bf16.msra.mxu0 %v374
  %403 = vmatprep.subr.bf16.mxu0 0
  %404 = vmatpush1.bf16.msra.mxu0 %v375
  %405 = vmatprep.subr.bf16.mxu0 0
  %406 = vmatpush1.bf16.msra.mxu0 %v376
  %407 = vmatprep.subr.bf16.mxu0 0
  %408 = vmatpush1.bf16.msra.mxu0 0
  %409 = vmatprep.subr.bf16.mxu0 0
  %410 = vmatpush1.bf16.msra.mxu0 0
  %411 = vmatprep.subr.bf16.mxu0 0
  %412 = vmatpush1.bf16.msra.mxu0 0
  %413 = vmatprep.subr.bf16.mxu0 0
  %414 = vmatpush1.bf16.msra.mxu0 0
  %415 = vmatprep.subr.bf16.mxu0 0
  %416 = vmatpush1.bf16.msra.mxu0 0
  %417 = vmatprep.subr.bf16.mxu0 0
  %418 = vmatpush1.bf16.msra.mxu0 0
  %419 = vmatprep.subr.bf16.mxu0 0
  %420 = vmatpush1.bf16.msra.mxu0 0
  %421 = vmatprep.subr.bf16.mxu0 0
  %422 = vmatpush1.bf16.msra.mxu0 0
  %423 = vmatprep.subr.bf16.mxu0 0
  %424 = vmatpush1.bf16.msra.mxu0 0
  %425 = vmatprep.subr.bf16.mxu0 0
  %426 = vmatpush1.bf16.msra.mxu0 0
  %427 = vmatprep.subr.bf16.mxu0 0
  %428 = vmatpush1.bf16.msra.mxu0 0
  %429 = vmatprep.subr.bf16.mxu0 0
  %430 = vmatpush1.bf16.msra.mxu0 0
  %431 = vmatprep.mubr.bf16.mxu0 0
  %432 = vmatmul.mubr.bf16.gmra.mrb[0].mxu0 %v397
  %v433 = vpop.f32.mrb[0].mxu0
  %v434 = vadd.f32 %v384, %v433
  %v435 = vpop.f32.mrb[0].mxu0
  %v436 = vpop.f32.mrb[0].mxu0
  %v437 = vadd.f32 %v389, %v436
  %v438 = vpop.f32.mrb[0].mxu0
  %439 = vdwg.mxu0
  %vm440 = vcmask 15360
  %441 = vst.msk [vmem:[%s7] sm:$0xff] %vm440, %v434
  %442 = vst.msk [vmem:[%s7 + $0x8] sm:$0xff] %vm440, %v437
  %v443 = vtanh.pop %v434
  %v444 = vtanh.pop %v437
  %v445 = vmul.f32 %v443, %v443
  %v446 = vmul.f32 %v444, %v444
  %v447 = vsel %vm440, %v445, 0.0
  %v448 = vsel %vm440, %v446, 0.0
  %v449 = vadd.f32 %v447, %v448
  %v450 = vrot.slane %v449, 4
  %v451 = vadd.f32 %v449, %v450
  %v452 = vrot.slane %v451, 2
  %v453 = vadd.f32 %v451, %v452
  %v454 = vrot.slane %v453, 1
  %v455 = vadd.f32 %v453, %v454
  %v456 = vrsqrt.pop %v455
  %v457 = vmul.f32 %v443, %v456
  %v458 = vmul.f32 %v444, %v456
  %459 = vst.msk [vmem:[%s8] sm:$0xff] %vm440, %v457
  %460 = vst.msk [vmem:[%s8 + $0x8] sm:$0xff] %vm440, %v458
  // Predicated region
  $region30: #{tpu_custom_call.1} parent=0 // pred_check
    _
  $region31: #{tpu_custom_call.1} parent=0 // pred_check_branch
    %462 = sbr.rel (0) target = $region33
  $region32: #{tpu_custom_call.1} parent=0 // pred_region
    _
  $region33: #{tpu_custom_call.1} parent=0 // pred_fallthru
    _
  // Predicated region
  $region34: #{tpu_custom_call.1} parent=0 // pred_check
    _
  $region35: #{tpu_custom_call.1} parent=0 // pred_check_branch
    %464 = sbr.rel (0) target = $region37
  $region36: #{tpu_custom_call.1} parent=0 // pred_region
    _
  $region37: #{tpu_custom_call.1} parent=0 // pred_fallthru
    _
  // Predicated region
  $region38: #{tpu_custom_call.1} parent=0 // pred_check
    _
  $region39: #{tpu_custom_call.1} parent=0 // pred_check_branch
    %466 = sbr.rel (0) target = $region41
  $region40: #{tpu_custom_call.1} parent=0 // pred_region
    _
  $region41: #{tpu_custom_call.1} parent=0 // pred_fallthru
    _
  // Predicated region
  $region42: #{tpu_custom_call.1} parent=0 // pred_check
    _
  $region43: #{tpu_custom_call.1} parent=0 // pred_check_branch
    %468 = sbr.rel (0) target = $region45
  $region44: #{tpu_custom_call.1} parent=0 // pred_region
    _
  $region45: #{tpu_custom_call.1} parent=0 // pred_fallthru
    _

</llo_original>
